<compile_context>
chip_gen: v7x
topology: tpu7x:2x2x1
jax: 0.10.0
libtpu: 0.0.40
codegen_flags: <defaults>
</compile_context>

<pallas_src>
import functools

import jax
import jax.numpy as jnp
from jax.experimental import pallas as pl
from jax.experimental.pallas import tpu as pltpu


def _round_up(a, b):
    return ((a + b - 1) // b) * b


def _make_kernel(confidence, smoothing, C, TC, grid_c):
    """Builds the Pallas kernel body with compile-time constants baked in."""
    inv_c = 1.0 / float(C)
    smooth_w = smoothing * inv_c
    target_w = confidence + smooth_w
    ragged_c = (grid_c * TC) > C      # compile-time: last class tile is ragged?

    def kernel(x_ref, t_ref, o_ref, m_sc, s_sc, acc_sc):
        k = pl.program_id(1)          # class tile index (trailing reduction axis)

        # ---- init per-row running stats at the first class tile ------------
        @pl.when(k == 0)
        def _init():
            m_sc[...] = jnp.full_like(m_sc, -jnp.inf)
            s_sc[...] = jnp.zeros_like(s_sc)
            acc_sc[...] = jnp.zeros_like(acc_sc)

        # TODO(synk): for bf16 logits on v6e/v7x, keep compare/select/weight
        # math in bf16 and upcast only the exp/sum path; inputs here are f32.
        x = x_ref[...].astype(jnp.float32)                       # (TB, TC)
        t_local = t_ref[...] - k * TC                            # (TB, 1)
        lcol = jax.lax.broadcasted_iota(jnp.int32, x.shape, 1)   # 0..TC-1

        # Fused pick + mean:  sum(x * w) == confidence*x[t] + (smoothing/C)*sum(x)
        w = jnp.where(lcol == t_local, target_w, smooth_w)

        def update(x_lse, x_w):
            # online logsumexp over class tiles
            local_m = jnp.max(x_lse, axis=-1, keepdims=True)
            new_m = jnp.maximum(m_sc[...], local_m)
            s_sc[...] = (s_sc[...] * jnp.exp(m_sc[...] - new_m)
                         + jnp.sum(jnp.exp(x_lse - new_m), axis=-1, keepdims=True))
            m_sc[...] = new_m
            # fused weighted accumulator
            acc_sc[...] += jnp.sum(x_w * w, axis=-1, keepdims=True)

        if ragged_c:
            last = pl.num_programs(1) - 1

            @pl.when(k < last)             # interior tiles: no masking cost
            def _fast():
                update(x, x)

            @pl.when(k == last)            # only the ragged tile pays the masks
            def _masked():
                valid = lcol < (C - k * TC)
                update(jnp.where(valid, x, -jnp.inf),
                       jnp.where(valid, x, 0.0))
        else:
            update(x, x)

        # ---- finalize: per-row loss = lse - acc  (confidence+smoothing == 1)
        @pl.when(k == pl.num_programs(1) - 1)
        def _finalize():
            o_ref[...] = m_sc[...] + jnp.log(s_sc[...]) - acc_sc[...]

    return kernel


@functools.partial(jax.jit, static_argnames=("smoothing", "block_b", "block_c"))
def label_smoothing_loss(x, target, smoothing=0.0, *, block_b=512, block_c=4096):
    """Pallas implementation of LabelSmoothing.forward(x, target) -> scalar."""
    confidence = 1.0 - smoothing
    B, C = x.shape

    # ---- class tiling: one full-width tile when C fits, else 128-multiples.
    if C <= block_c:
        TC = C                      # block dim == full dim (no divisibility rule),
    else:                           # class grid collapses to 1
        TC = block_c
        assert TC % 128 == 0, "block_c must be a multiple of 128 when C > block_c"
    grid_c = pl.cdiv(C, TC)

    # ---- batch tiling: no HBM padding; ragged last-block writes are dropped.
    if B <= block_b:
        TB = B
        if B >= 16:
            # give v7x megacore's "parallel" axis at least 2 batch blocks
            half = _round_up(-(-B // 2), 8)
            if half < B:
                TB = half
    else:
        TB = block_b
        assert TB % 8 == 0, "block_b must be a multiple of 8 when B > block_b"
    grid_b = pl.cdiv(B, TB)

    t2 = target.astype(jnp.int32).reshape(B, 1)

    per_row = pl.pallas_call(
        _make_kernel(confidence, smoothing, C, TC, grid_c),
        out_shape=jax.ShapeDtypeStruct((B, 1), jnp.float32),
        grid_spec=pltpu.PrefetchScalarGridSpec(
            num_scalar_prefetch=0,
            grid=(grid_b, grid_c),
            in_specs=[
                pl.BlockSpec((TB, TC), lambda i, k: (i, k)),   # logits tile
                pl.BlockSpec((TB, 1), lambda i, k: (i, 0)),    # targets
            ],
            out_specs=pl.BlockSpec((TB, 1), lambda i, k: (i, 0)),
            scratch_shapes=[
                pltpu.VMEM((TB, 1), jnp.float32),   # running max
                pltpu.VMEM((TB, 1), jnp.float32),   # running sum-exp
                pltpu.VMEM((TB, 1), jnp.float32),   # fused weighted accumulator
            ],
        ),
        compiler_params=pltpu.CompilerParams(
            dimension_semantics=("parallel", "arbitrary"),
            vmem_limit_bytes=48 << 20,
        ),
    )(x, t2)

    # Exact (B,1) output: tiny final mean in JAX, no padded rows to mask.
    return jnp.sum(per_row) / B


def _reference(x, target, smoothing):
    """Pure-JAX reference mirroring the PyTorch module."""
    confidence = 1.0 - smoothing
    logprobs = jax.nn.log_softmax(x.astype(jnp.float32), axis=-1)
    nll = -jnp.take_along_axis(logprobs, target[:, None], axis=-1)[:, 0]
    smooth = -jnp.mean(logprobs, axis=-1)
    return jnp.mean(confidence * nll + smoothing * smooth)


if __name__ == "__main__":
    key = jax.random.PRNGKey(0)
    k1, k2, k3, k4 = jax.random.split(key, 4)
    smoothing = 0.1

    # Test 1: small shape, single grid step (batch=8, classes=16).
    B, C = 8, 16
    x = jax.random.normal(k1, (B, C), dtype=jnp.float32)
    target = jax.random.randint(k2, (B,), 0, C, dtype=jnp.int32)

    loss = jax.block_until_ready(label_smoothing_loss(x, target, smoothing=smoothing))
    ref = _reference(x, target, smoothing)
    assert jnp.allclose(loss, ref, atol=1e-5, rtol=1e-5), (loss, ref)

    # Test 2: force a real multi-block grid with ragged last blocks in both
    # batch (20 rows, TB=8 -> dropped OOB output rows) and class (200 cols,
    # TC=128 -> masked last tile + online logsumexp across tiles).
    B2, C2 = 20, 200
    x2 = jax.random.normal(k3, (B2, C2), dtype=jnp.float32)
    target2 = jax.random.randint(k4, (B2,), 0, C2, dtype=jnp.int32)

    loss2 = jax.block_until_ready(
        label_smoothing_loss(x2, target2, smoothing=smoothing, block_b=8, block_c=128)
    )
    ref2 = _reference(x2, target2, smoothing)
    assert jnp.allclose(loss2, ref2, atol=1e-5, rtol=1e-5), (loss2, ref2)

    print("KERNEL_OK")
</pallas_src>

<mosaic_0001>
module attributes {stable_mosaic.version = 11 : i64} {
  func.func @kernel(%arg0: i32, %arg1: i32, %arg2: memref<8x16xf32, #tpu.memory_space<vmem>>, %arg3: memref<8x1xi32, #tpu.memory_space<vmem>>, %arg4: memref<8x1xf32, #tpu.memory_space<vmem>>, %arg5: memref<8x1xf32, #tpu.memory_space<vmem>>, %arg6: memref<8x1xf32, #tpu.memory_space<vmem>>, %arg7: memref<8x1xf32, #tpu.memory_space<vmem>>) attributes {dimension_semantics = [#tpu.dimension_semantics<parallel>, #tpu.dimension_semantics<arbitrary>], iteration_bounds = array<i64: 1, 1>, scalar_prefetch = 0 : i64, scratch_operands = 3 : i64, tpu.core_type = #tpu.core_type<tc>, window_params = [{transform_indices = @transform_0, window_bounds = array<i64: 8, 16>}, {transform_indices = @transform_1, window_bounds = array<i64: 8, 1>}, {transform_indices = @transform_2, window_bounds = array<i64: 8, 1>}]} {
    %c0_i32 = arith.constant 0 : i32
    %0 = arith.cmpi eq, %arg1, %c0_i32 : i32
    %1 = arith.extui %0 : i1 to i32
    %c0_i32_0 = arith.constant 0 : i32
    %2 = arith.cmpi ne, %1, %c0_i32_0 : i32
    scf.if %2 {
      %cst_24 = arith.constant 0xFF800000 : f32
      %40 = vector.broadcast %cst_24 : f32 to vector<8x1xf32>
      %c0_25 = arith.constant 0 : index
      %c0_26 = arith.constant 0 : index
      %41 = vector.load %arg5[%c0_25, %c0_26] : memref<8x1xf32, #tpu.memory_space<vmem>>, vector<8x1xf32>
      tpu.vector_store %arg5[%c0_25, %c0_26], %40 {strides = array<i32>} : memref<8x1xf32, #tpu.memory_space<vmem>>, vector<8x1xf32>,
      %cst_27 = arith.constant 0.000000e+00 : f32
      %42 = vector.broadcast %cst_27 : f32 to vector<8x1xf32>
      %c0_28 = arith.constant 0 : index
      %c0_29 = arith.constant 0 : index
      %43 = vector.load %arg6[%c0_28, %c0_29] : memref<8x1xf32, #tpu.memory_space<vmem>>, vector<8x1xf32>
      tpu.vector_store %arg6[%c0_28, %c0_29], %42 {strides = array<i32>} : memref<8x1xf32, #tpu.memory_space<vmem>>, vector<8x1xf32>,
      %cst_30 = arith.constant 0.000000e+00 : f32
      %44 = vector.broadcast %cst_30 : f32 to vector<8x1xf32>
      %c0_31 = arith.constant 0 : index
      %c0_32 = arith.constant 0 : index
      %45 = vector.load %arg7[%c0_31, %c0_32] : memref<8x1xf32, #tpu.memory_space<vmem>>, vector<8x1xf32>
      tpu.vector_store %arg7[%c0_31, %c0_32], %44 {strides = array<i32>} : memref<8x1xf32, #tpu.memory_space<vmem>>, vector<8x1xf32>,
    } else {
    }
    %c0 = arith.constant 0 : index
    %c0_1 = arith.constant 0 : index
    %3 = vector.load %arg2[%c0, %c0_1] : memref<8x16xf32, #tpu.memory_space<vmem>>, vector<8x16xf32>
    %c0_2 = arith.constant 0 : index
    %c0_3 = arith.constant 0 : index
    %4 = vector.load %arg3[%c0_2, %c0_3] : memref<8x1xi32, #tpu.memory_space<vmem>>, vector<8x1xi32>
    %c16_i32 = arith.constant 16 : i32
    %5 = arith.muli %arg1, %c16_i32 : i32
    %6 = vector.broadcast %5 : i32 to vector<8x1xi32>
    %7 = arith.subi %4, %6 : vector<8x1xi32>
    %8 = tpu.iota {dimensions = array<i32: 1>} : vector<8x16xi32>
    %9 = vector.broadcast %7 : vector<8x1xi32> to vector<8x16xi32>
    %10 = arith.cmpi eq, %8, %9 : vector<8x16xi32>
    %cst = arith.constant 9.062500e-01 : f32
    %cst_4 = arith.constant 6.250000e-03 : f32
    %11 = vector.broadcast %cst : f32 to vector<8x16xf32>
    %12 = vector.broadcast %cst_4 : f32 to vector<8x16xf32>
    %13 = arith.select %10, %11, %12 : vector<8x16xi1>, vector<8x16xf32>
    %cst_5 = arith.constant dense<0xFF800000> : vector<8xf32>
    %14 = vector.multi_reduction <maximumf>, %3, %cst_5 [1] : vector<8x16xf32> to vector<8xf32>
    %15 = vector.shape_cast %14 : vector<8xf32> to vector<8x1xf32>
    %c0_6 = arith.constant 0 : index
    %c0_7 = arith.constant 0 : index
    %16 = vector.load %arg5[%c0_6, %c0_7] : memref<8x1xf32, #tpu.memory_space<vmem>>, vector<8x1xf32>
    %17 = arith.maximumf %16, %15 : vector<8x1xf32>
    %c0_8 = arith.constant 0 : index
    %c0_9 = arith.constant 0 : index
    %18 = vector.load %arg6[%c0_8, %c0_9] : memref<8x1xf32, #tpu.memory_space<vmem>>, vector<8x1xf32>
    %c0_10 = arith.constant 0 : index
    %c0_11 = arith.constant 0 : index
    %19 = vector.load %arg5[%c0_10, %c0_11] : memref<8x1xf32, #tpu.memory_space<vmem>>, vector<8x1xf32>
    %20 = arith.subf %19, %17 : vector<8x1xf32>
    %21 = math.exp %20 : vector<8x1xf32>
    %22 = arith.mulf %18, %21 : vector<8x1xf32>
    %23 = vector.broadcast %17 : vector<8x1xf32> to vector<8x16xf32>
    %24 = arith.subf %3, %23 : vector<8x16xf32>
    %25 = math.exp %24 : vector<8x16xf32>
    %cst_12 = arith.constant dense<0.000000e+00> : vector<8xf32>
    %26 = vector.multi_reduction <add>, %25, %cst_12 [1] : vector<8x16xf32> to vector<8xf32>
    %27 = vector.shape_cast %26 : vector<8xf32> to vector<8x1xf32>
    %28 = arith.addf %22, %27 : vector<8x1xf32>
    %c0_13 = arith.constant 0 : index
    %c0_14 = arith.constant 0 : index
    %29 = vector.load %arg6[%c0_13, %c0_14] : memref<8x1xf32, #tpu.memory_space<vmem>>, vector<8x1xf32>
    tpu.vector_store %arg6[%c0_13, %c0_14], %28 {strides = array<i32>} : memref<8x1xf32, #tpu.memory_space<vmem>>, vector<8x1xf32>,
    %c0_15 = arith.constant 0 : index
    %c0_16 = arith.constant 0 : index
    %30 = vector.load %arg5[%c0_15, %c0_16] : memref<8x1xf32, #tpu.memory_space<vmem>>, vector<8x1xf32>
    tpu.vector_store %arg5[%c0_15, %c0_16], %17 {strides = array<i32>} : memref<8x1xf32, #tpu.memory_space<vmem>>, vector<8x1xf32>,
    %c0_17 = arith.constant 0 : index
    %c0_18 = arith.constant 0 : index
    %31 = vector.load %arg7[%c0_17, %c0_18] : memref<8x1xf32, #tpu.memory_space<vmem>>, vector<8x1xf32>
    %32 = arith.mulf %3, %13 : vector<8x16xf32>
    %cst_19 = arith.constant dense<0.000000e+00> : vector<8xf32>
    %33 = vector.multi_reduction <add>, %32, %cst_19 [1] : vector<8x16xf32> to vector<8xf32>
    %34 = vector.shape_cast %33 : vector<8xf32> to vector<8x1xf32>
    %35 = arith.addf %31, %34 : vector<8x1xf32>
    %c0_20 = arith.constant 0 : index
    %c0_21 = arith.constant 0 : index
    %36 = vector.load %arg7[%c0_20, %c0_21] : memref<8x1xf32, #tpu.memory_space<vmem>>, vector<8x1xf32>
    tpu.vector_store %arg7[%c0_20, %c0_21], %35 {strides = array<i32>} : memref<8x1xf32, #tpu.memory_space<vmem>>, vector<8x1xf32>,
    %c0_i32_22 = arith.constant 0 : i32
    %37 = arith.cmpi eq, %arg1, %c0_i32_22 : i32
    %38 = arith.extui %37 : i1 to i32
    %c0_i32_23 = arith.constant 0 : i32
    %39 = arith.cmpi ne, %38, %c0_i32_23 : i32
    scf.if %39 {
      %c0_24 = arith.constant 0 : index
      %c0_25 = arith.constant 0 : index
      %40 = vector.load %arg5[%c0_24, %c0_25] : memref<8x1xf32, #tpu.memory_space<vmem>>, vector<8x1xf32>
      %c0_26 = arith.constant 0 : index
      %c0_27 = arith.constant 0 : index
      %41 = vector.load %arg6[%c0_26, %c0_27] : memref<8x1xf32, #tpu.memory_space<vmem>>, vector<8x1xf32>
      %42 = math.log %41 : vector<8x1xf32>
      %43 = arith.addf %40, %42 : vector<8x1xf32>
      %c0_28 = arith.constant 0 : index
      %c0_29 = arith.constant 0 : index
      %44 = vector.load %arg7[%c0_28, %c0_29] : memref<8x1xf32, #tpu.memory_space<vmem>>, vector<8x1xf32>
      %45 = arith.subf %43, %44 : vector<8x1xf32>
      %c0_30 = arith.constant 0 : index
      %c0_31 = arith.constant 0 : index
      %46 = vector.load %arg4[%c0_30, %c0_31] : memref<8x1xf32, #tpu.memory_space<vmem>>, vector<8x1xf32>
      tpu.vector_store %arg4[%c0_30, %c0_31], %45 {strides = array<i32>} : memref<8x1xf32, #tpu.memory_space<vmem>>, vector<8x1xf32>,
    } else {
    }
    return
  }
  func.func @transform_0(%arg0: i32, %arg1: i32) -> (i32, i32) {
    %c0_i32 = arith.constant 0 : i32
    return %arg0, %arg1 : i32, i32
  }
  func.func @transform_1(%arg0: i32, %arg1: i32) -> (i32, i32) {
    %c0_i32 = arith.constant 0 : i32
    %c0_i32_0 = arith.constant 0 : i32
    return %arg0, %c0_i32 : i32, i32
  }
  func.func @transform_2(%arg0: i32, %arg1: i32) -> (i32, i32) {
    %c0_i32 = arith.constant 0 : i32
    %c0_i32_0 = arith.constant 0 : i32
    return %arg0, %c0_i32 : i32, i32
  }
}

</mosaic_0001>

<llo_original>
// kernel: label_smoothing_loss.1
$region0: #{label_smoothing_loss.1}
  #allocation0 [shape = 'u32[]', space=smem, size = 0x4, offset = 0x4, fixed_abs, tag = 'smem constant byte address 0x4 - core index']
  #allocation1 [shape = 'u32[144,128]{1,0:T(1,128)}', space=vmem, size = 0x12000, scoped, tag = 'internal scratch']
  #allocation2 [shape = 'f32[8,1]{1,0:T(8,128)}', space=vmem, size = 0x1000, scoped, tag = 'scratch operand']
  #allocation3 [shape = 'f32[8,1]{1,0:T(8,128)}', space=vmem, size = 0x1000, scoped, tag = 'scratch operand']
  #allocation4 [shape = 'f32[8,1]{1,0:T(8,128)}', space=vmem, size = 0x1000, scoped, tag = 'scratch operand']
  %s0 = inlined_call_operand.vmem [shape: f32[8,16], index: 0, kind: input, shape index: {}]
  %s1 = inlined_call_operand.vmem [shape: s32[8,1], index: 1, kind: input, shape index: {}]
  %s2 = inlined_call_operand.vmem [shape: f32[8,1], index: 2, kind: output, shape index: {}]
  %s3 = sld [smem:[#allocation0]]
  $region26: #{label_smoothing_loss.1} parent=0
    _
  %s5 = ssub.s32 1, %s3
  %s6 = scalar_select 0, %s5, %s3
  // Predicated region
  $region2: #{label_smoothing_loss.1} parent=0 // pred_check
    _
  $region3: #{label_smoothing_loss.1} parent=0 // pred_check_branch
    %8 = sbr.rel (0) target = $region5
  $region4: #{label_smoothing_loss.1} parent=0 // pred_region
    _
  $region5: #{label_smoothing_loss.1} parent=0 // pred_fallthru
    _
  // Predicated region
  $region6: #{label_smoothing_loss.1} parent=0 // pred_check
    _
  $region7: #{label_smoothing_loss.1} parent=0 // pred_check_branch
    %10 = sbr.rel (0) target = $region9
  $region8: #{label_smoothing_loss.1} parent=0 // pred_region
    _
  $region9: #{label_smoothing_loss.1} parent=0 // pred_fallthru
    _
  %p11 = scmp.eq.s32.totalorder 0, 0
  // Predicated region
  $region10: #{label_smoothing_loss.1} parent=0 // pred_check
    %p12 = pneg %p11
  $region11: #{label_smoothing_loss.1} parent=0 // pred_check_branch
    %14 = sbr.rel (%p12) target = $region13
  $region12: #{label_smoothing_loss.1} parent=0 // pred_region
    %vm15 = vcmask 7168
    %16 = vst.msk [vmem:[#allocation2] sm:$0xff] %vm15, -inf
    %17 = vst.msk [vmem:[#allocation3] sm:$0xff] %vm15, 0.0
    %18 = vst.msk [vmem:[#allocation4] sm:$0xff] %vm15, 0.0
  $region13: #{label_smoothing_loss.1} parent=0 // pred_fallthru
    _
  %v19 = vld [vmem:[%s0] sm:$0xff]
  %v20 = vld [vmem:[%s1] sm:$0xff]
  %s21 = smul.u32 0, 16
  %v22 = vstv %s21
  %v23 = vsub.s32 %v20, %v22
  %v24 = vlaneseq
  %v25 = vand.u32 %v24, 127
  %26 = vset.pattern.permute.xlu0 0
  %27 = vperm.xlu0 %26, %v23
  %v28 = vpop.permute.xlu0 %27
  %vm29 = vcmp.eq.s32.totalorder %v25, %v28
  %v30 = vsel %vm29, 0.90625, 0.00625
  %vm31 = vcmask 130048
  %v32 = vsel %vm31, %v19, -inf
  %33 = vmax.xlane.f32.xlu0 %v32
  %v34 = vpop.xlane.xlu0 %33
  %v35 = vld [vmem:[#allocation2] sm:$0xff]
  %v36 = vmax.f32 %v35, %v34
  %v37 = vld [vmem:[#allocation3] sm:$0xff]
  %v38 = vsub.f32 %v35, %v36
  %v39 = vmul.f32 %v38, 1.442695
  %v40 = vpow.pop %v39
  %v41 = vmul.f32 %v37, %v40
  %43 = vset.pattern.permute.xlu0 0
  %44 = vperm.xlu0 %43, %v36
  %v45 = vpop.permute.xlu0 %44
  %v47 = vsub.f32 %v19, %v45
  %v48 = vmul.f32 %v47, 1.442695
  %v49 = vpow.pop %v48
  %v50 = vsel %vm31, %v49, 0.0
  %51 = vadd.xlane.f32.xlu0 %v50
  %v52 = vpop.xlane.xlu0 %51
  %v53 = vadd.f32 %v41, %v52
  %vm54 = vcmask 7168
  %55 = vst.msk [vmem:[#allocation3] sm:$0xff] %vm54, %v53
  %56 = vst.msk [vmem:[#allocation2] sm:$0xff] %vm54, %v36
  %v57 = vld [vmem:[#allocation4] sm:$0xff]
  %v58 = vmul.f32 %v19, %v30
  %v59 = vsel %vm31, %v58, 0.0
  %60 = vadd.xlane.f32.xlu0 %v59
  %v61 = vpop.xlane.xlu0 %60
  %v62 = vadd.f32 %v57, %v61
  %63 = vst.msk [vmem:[#allocation4] sm:$0xff] %vm54, %v62
  // Predicated region
  $region14: #{label_smoothing_loss.1} parent=0 // pred_check
    %p64 = pneg %p11
  $region15: #{label_smoothing_loss.1} parent=0 // pred_check_branch
    %66 = sbr.rel (%p64) target = $region17
  $region16: #{label_smoothing_loss.1} parent=0 // pred_region
    %v67 = vld [vmem:[#allocation2] sm:$0xff]
    %v68 = vld [vmem:[#allocation3] sm:$0xff]
    %v69 = vlog2.pop %v68
    %v70 = vmul.f32 %v69, 0.6931472
    %v71 = vadd.f32 %v67, %v70
    %v72 = vld [vmem:[#allocation4] sm:$0xff]
    %v73 = vsub.f32 %v71, %v72
    %74 = vst.msk [vmem:[%s2] sm:$0xff] %vm54, %v73
  $region17: #{label_smoothing_loss.1} parent=0 // pred_fallthru
    _
  // Predicated region
  $region18: #{label_smoothing_loss.1} parent=0 // pred_check
    _
  $region19: #{label_smoothing_loss.1} parent=0 // pred_check_branch
    %76 = sbr.rel (0) target = $region21
  $region20: #{label_smoothing_loss.1} parent=0 // pred_region
    _
  $region21: #{label_smoothing_loss.1} parent=0 // pred_fallthru
    _
  // Predicated region
  $region22: #{label_smoothing_loss.1} parent=0 // pred_check
    _
  $region23: #{label_smoothing_loss.1} parent=0 // pred_check_branch
    %78 = sbr.rel (0) target = $region25
  $region24: #{label_smoothing_loss.1} parent=0 // pred_region
    _
  $region25: #{label_smoothing_loss.1} parent=0 // pred_fallthru
    _

</llo_original>
